<compile_context>
chip_gen: v7x
topology: tpu7x:2x2x1
jax: 0.10.0
libtpu: 0.0.40
codegen_flags: <defaults>
</compile_context>

<pallas_src>
import functools
import math

import jax
import jax.numpy as jnp
from jax import lax
from jax.experimental import pallas as pl
from jax.experimental.pallas import tpu as pltpu

_INV_SQRT2 = 0.7071067811865476  # 1/sqrt(2) as an f32 literal (no divide)


def _round_up(n, m):
    return ((n + m - 1) // m) * m


def _cdiv(a, b):
    return (a + b - 1) // b


def _pad_to(x, shape):
    return jnp.pad(x, [(0, s - d) for d, s in zip(x.shape, shape)])


def time_encoding_pis_kernel(t_ref, pe2_ref, phase2_ref,
                             w1_ref, b1_ref, w2_ref, b2_ref,
                             o_ref, *, use_bf16, approx_gelu):
    t = t_ref[...]                                            # [TB, 1] f32
    # cos(x) == sin(x + pi/2): one sin over the doubled table replaces
    # sin/cos + lane-axis concat.
    emb = jnp.sin(t * pe2_ref[...] + phase2_ref[...])         # [TB, Kp]

    lhs1 = emb.astype(jnp.bfloat16) if use_bf16 else emb
    h = jnp.dot(lhs1, w1_ref[...],
                preferred_element_type=jnp.float32) + b1_ref[...]

    if approx_gelu:
        # tanh-based GELU -> EUP slot (frees the VALU erf polynomial).
        h = jax.nn.gelu(h, approximate=True)
    else:
        # Exact erf GELU, matching torch nn.GELU() default.
        h = 0.5 * h * (1.0 + lax.erf(h * jnp.float32(_INV_SQRT2)))

    lhs2 = h.astype(jnp.bfloat16) if use_bf16 else h
    out = jnp.dot(lhs2, w2_ref[...],
                  preferred_element_type=jnp.float32) + b2_ref[...]
    o_ref[...] = out.astype(o_ref.dtype)


def time_encoding_pis(t, pe, phase, w1, b1, w2, b2, *, tb=512,
                      use_bf16_matmul=False, approximate_gelu=False,
                      use_pallas=True, return_padded=False):
    """TimeEncodingPIS forward.

    t : scalar float or array [B] / [B, 1]
    pe, phase : [1, H]
    w1 : [2H, hidden], b1 : [hidden] or [1, hidden]   (weights stored [in, out])
    w2 : [hidden, dim], b2 : [dim] or [1, dim]
    Returns [B, dim] float32 (B=1 for scalar t), or the padded [Bp, Dp]
    buffer if return_padded=True.
    """
    t = jnp.asarray(t, jnp.float32)
    if t.ndim == 0:
        t = t.reshape(1, 1)
    elif t.ndim == 1:
        t = t.reshape(-1, 1)
    B = t.shape[0]
    H = pe.shape[-1]
    hidden = w1.shape[1]
    dim = w2.shape[1]

    b1_row = jnp.asarray(b1, jnp.float32).reshape(1, -1)
    b2_row = jnp.asarray(b2, jnp.float32).reshape(1, -1)

    if not use_pallas:
        # Plain-XLA path for tiny batches: the whole op is a few us of compute
        # and pallas_call launch overhead would dominate.
        arg = t * pe + phase
        emb = jnp.concatenate([jnp.sin(arg), jnp.cos(arg)], axis=-1)
        h = jax.nn.gelu(emb @ w1 + b1_row, approximate=approximate_gelu)
        return h @ w2 + b2_row

    # ---- parameter prep (once per call, outside the kernel) ---------------
    pe2 = jnp.concatenate([pe, pe], axis=-1).astype(jnp.float32)          # [1, 2H]
    phase2 = jnp.concatenate([phase, phase + (math.pi / 2.0)],
                             axis=-1).astype(jnp.float32)                 # [1, 2H]

    Kp = _round_up(2 * H, 128)
    Hp = _round_up(hidden, 128)
    Dp = _round_up(dim, 128)

    # Zero padding is load-bearing (padded emb columns = sin(0) = 0, padded
    # weight rows/cols = 0) -> padding contributes nothing to real outputs.
    wdt = jnp.bfloat16 if use_bf16_matmul else jnp.float32
    pe2_p = _pad_to(pe2, (1, Kp))
    phase2_p = _pad_to(phase2, (1, Kp))
    w1_p = _pad_to(jnp.asarray(w1, jnp.float32), (Kp, Hp)).astype(wdt)
    b1_p = _pad_to(b1_row, (1, Hp))
    w2_p = _pad_to(jnp.asarray(w2, jnp.float32), (Hp, Dp)).astype(wdt)
    b2_p = _pad_to(b2_row, (1, Dp))

    # ---- batch tiling ------------------------------------------------------
    # TB multiple of 8; cap at ceil(B/2) so the grid has >=2 steps whenever B
    # allows it (v7x has 2 TensorCores and "parallel" only helps with >=2).
    B8 = _round_up(B, 8)
    tb_cap = max(8, _round_up(_cdiv(B8, 2), 8))
    TB = min(_round_up(tb, 8), tb_cap)
    Bp = _round_up(B8, TB)
    t_p = _pad_to(t, (Bp, 1))
    grid = (Bp // TB,)

    kernel = functools.partial(time_encoding_pis_kernel,
                               use_bf16=use_bf16_matmul,
                               approx_gelu=approximate_gelu)

    # ---- VMEM budget + cost estimate (plain Python ints) -------------------
    wbytes = 2 if use_bf16_matmul else 4
    param_bytes_1x = (2 * Kp * 4            # pe2, phase2
                      + Kp * Hp * wbytes + Hp * 4
                      + Hp * Dp * wbytes + Dp * 4)
    io_bytes = 2 * (TB * 4 + TB * Dp * 4)   # double-buffered t tile + out tile
    cost = pl.CostEstimate(
        flops=2 * Bp * (Kp * Hp + Hp * Dp),
        transcendentals=Bp * (Kp + Hp),
        bytes_accessed=param_bytes_1x + Bp * 4 + Bp * Dp * 4)

    def build(single_buffer_params):
        def res_spec(shape):
            idx = lambda i: (0,) * len(shape)
            if single_buffer_params:
                # Constant block -> double-buffering only doubles VMEM.
                return pl.BlockSpec(shape, idx, pipeline_mode=pl.Buffered(1))
            return pl.BlockSpec(shape, idx)

        buf = 1 if single_buffer_params else 2
        vmem_need = buf * param_bytes_1x + io_bytes
        vmem_limit = min(int(1.5 * vmem_need) + (4 << 20), 100 << 20)

        return pl.pallas_call(
            kernel,
            out_shape=jax.ShapeDtypeStruct((Bp, Dp), jnp.float32),
            grid_spec=pltpu.PrefetchScalarGridSpec(
                num_scalar_prefetch=0,
                grid=grid,
                in_specs=[
                    pl.BlockSpec((TB, 1), lambda i: (i, 0)),   # t tile
                    res_spec((1, Kp)),                         # pe2
                    res_spec((1, Kp)),                         # phase2
                    res_spec((Kp, Hp)),                        # w1
                    res_spec((1, Hp)),                         # b1
                    res_spec((Hp, Dp)),                        # w2
                    res_spec((1, Dp)),                         # b2
                ],
                out_specs=pl.BlockSpec((TB, Dp), lambda i: (i, 0)),
            ),
            compiler_params=pltpu.CompilerParams(
                dimension_semantics=("parallel",),
                vmem_limit_bytes=vmem_limit,
            ),
            cost_estimate=cost,
        )

    args = (t_p, pe2_p, phase2_p, w1_p, b1_p, w2_p, b2_p)
    try:
        out = build(single_buffer_params=True)(*args)
    except Exception:
        # pipeline_mode=pl.Buffered(1) unsupported on this jax version:
        # fall back to default double-buffered resident params.
        out = build(single_buffer_params=False)(*args)

    if return_padded:
        # Avoids an extra XLA slice pass when the consumer accepts padding.
        return out
    return out[:B, :dim]


if __name__ == "__main__":
    # Module hyperparameters (small, TPU-friendly)
    harmonics_dim = 64
    hidden_dim = 64
    dim = 32
    batch = 8

    key = jax.random.PRNGKey(0)
    k_phase, k_w1, k_b1, k_w2, k_b2, k_t = jax.random.split(key, 6)

    # Buffers / parameters (deterministic synthetic init)
    pe = jnp.linspace(0.1, 100.0, harmonics_dim, dtype=jnp.float32)[None, :]      # [1, H]
    timestep_phase = jax.random.normal(k_phase, (1, harmonics_dim), jnp.float32)  # [1, H]

    # Linear(2H -> hidden), Linear(hidden -> dim); weights stored [in, out]
    lim1 = 1.0 / math.sqrt(2 * harmonics_dim)
    w1 = jax.random.uniform(k_w1, (2 * harmonics_dim, hidden_dim), jnp.float32, -lim1, lim1)
    b1 = jax.random.uniform(k_b1, (1, hidden_dim), jnp.float32, -lim1, lim1)
    lim2 = 1.0 / math.sqrt(hidden_dim)
    w2 = jax.random.uniform(k_w2, (hidden_dim, dim), jnp.float32, -lim2, lim2)
    b2 = jax.random.uniform(k_b2, (1, dim), jnp.float32, -lim2, lim2)

    # Example time input: [B, 1] in (0, 1)
    t = jax.random.uniform(k_t, (batch, 1), jnp.float32)

    # Default (exact, f32) path.
    out = jax.block_until_ready(time_encoding_pis(t, pe, timestep_phase, w1, b1, w2, b2))

    # Pure-JAX reference (original sin/cos + concat formulation).
    arg = t * pe + timestep_phase
    emb = jnp.concatenate([jnp.sin(arg), jnp.cos(arg)], axis=-1)
    ref = jax.nn.gelu(emb @ w1 + b1, approximate=False) @ w2 + b2

    assert out.shape == (batch, dim)
    assert jnp.allclose(out, ref, atol=5e-5, rtol=5e-5), float(jnp.max(jnp.abs(out - ref)))

    # Exercise the bf16-at-the-MXU opt-in (looser tolerance by design).
    out_bf16 = jax.block_until_ready(
        time_encoding_pis(t, pe, timestep_phase, w1, b1, w2, b2, use_bf16_matmul=True))
    assert jnp.allclose(out_bf16, ref, atol=5e-2, rtol=5e-2)

    print("KERNEL_OK")
</pallas_src>

<mosaic_0001>
module attributes {stable_mosaic.version = 11 : i64} {
  func.func @time_encoding_pis_kernel(%arg0: i32, %arg1: memref<8x1xf32, #tpu.memory_space<vmem>>, %arg2: memref<1x128xf32, #tpu.memory_space<vmem>>, %arg3: memref<1x128xf32, #tpu.memory_space<vmem>>, %arg4: memref<128x128xf32, #tpu.memory_space<vmem>>, %arg5: memref<1x128xf32, #tpu.memory_space<vmem>>, %arg6: memref<128x128xf32, #tpu.memory_space<vmem>>, %arg7: memref<1x128xf32, #tpu.memory_space<vmem>>, %arg8: memref<8x128xf32, #tpu.memory_space<vmem>>) attributes {dimension_semantics = [#tpu.dimension_semantics<parallel>], iteration_bounds = array<i64: 1>, scalar_prefetch = 0 : i64, scratch_operands = 0 : i64, tpu.core_type = #tpu.core_type<tc>, window_params = [{transform_indices = @transform_0, window_bounds = array<i64: 8, 1>}, {pipeline_mode = #tpu.pipeline_mode<synchronous>, transform_indices = @transform_1, window_bounds = array<i64: 1, 128>}, {pipeline_mode = #tpu.pipeline_mode<synchronous>, transform_indices = @transform_2, window_bounds = array<i64: 1, 128>}, {pipeline_mode = #tpu.pipeline_mode<synchronous>, transform_indices = @transform_3, window_bounds = array<i64: 128, 128>}, {pipeline_mode = #tpu.pipeline_mode<synchronous>, transform_indices = @transform_4, window_bounds = array<i64: 1, 128>}, {pipeline_mode = #tpu.pipeline_mode<synchronous>, transform_indices = @transform_5, window_bounds = array<i64: 128, 128>}, {pipeline_mode = #tpu.pipeline_mode<synchronous>, transform_indices = @transform_6, window_bounds = array<i64: 1, 128>}, {transform_indices = @transform_7, window_bounds = array<i64: 8, 128>}]} {
    %c0 = arith.constant 0 : index
    %c0_0 = arith.constant 0 : index
    %0 = vector.load %arg1[%c0, %c0_0] : memref<8x1xf32, #tpu.memory_space<vmem>>, vector<8x1xf32>
    %c0_1 = arith.constant 0 : index
    %c0_2 = arith.constant 0 : index
    %1 = vector.load %arg2[%c0_1, %c0_2] : memref<1x128xf32, #tpu.memory_space<vmem>>, vector<1x128xf32>
    %2 = vector.broadcast %0 : vector<8x1xf32> to vector<8x128xf32>
    %3 = vector.broadcast %1 : vector<1x128xf32> to vector<8x128xf32>
    %4 = arith.mulf %2, %3 : vector<8x128xf32>
    %c0_3 = arith.constant 0 : index
    %c0_4 = arith.constant 0 : index
    %5 = vector.load %arg3[%c0_3, %c0_4] : memref<1x128xf32, #tpu.memory_space<vmem>>, vector<1x128xf32>
    %6 = vector.broadcast %5 : vector<1x128xf32> to vector<8x128xf32>
    %7 = arith.addf %4, %6 : vector<8x128xf32>
    %8 = math.sin %7 : vector<8x128xf32>
    %c0_5 = arith.constant 0 : index
    %c0_6 = arith.constant 0 : index
    %9 = vector.load %arg4[%c0_5, %c0_6] : memref<128x128xf32, #tpu.memory_space<vmem>>, vector<128x128xf32>
    %cst = arith.constant dense<0.000000e+00> : vector<8x128xf32>
    %10 = tpu.matmul %8, %9, %cst {dimension_numbers = #tpu.dot_dimension_numbers<[1], [0], [0], [1], [0, 0, 1, 1], [], []>} : vector<8x128xf32>, vector<128x128xf32>, vector<8x128xf32> -> vector<8x128xf32>
    %c0_7 = arith.constant 0 : index
    %c0_8 = arith.constant 0 : index
    %11 = vector.load %arg5[%c0_7, %c0_8] : memref<1x128xf32, #tpu.memory_space<vmem>>, vector<1x128xf32>
    %12 = vector.broadcast %11 : vector<1x128xf32> to vector<8x128xf32>
    %13 = arith.addf %10, %12 : vector<8x128xf32>
    %cst_9 = arith.constant 5.000000e-01 : f32
    %14 = vector.broadcast %cst_9 : f32 to vector<8x128xf32>
    %15 = arith.mulf %14, %13 : vector<8x128xf32>
    %cst_10 = arith.constant 0.707106769 : f32
    %16 = vector.broadcast %cst_10 : f32 to vector<8x128xf32>
    %17 = arith.mulf %13, %16 : vector<8x128xf32>
    %18 = math.erf %17 : vector<8x128xf32>
    %cst_11 = arith.constant 1.000000e+00 : f32
    %19 = vector.broadcast %cst_11 : f32 to vector<8x128xf32>
    %20 = arith.addf %19, %18 : vector<8x128xf32>
    %21 = arith.mulf %15, %20 : vector<8x128xf32>
    %c0_12 = arith.constant 0 : index
    %c0_13 = arith.constant 0 : index
    %22 = vector.load %arg6[%c0_12, %c0_13] : memref<128x128xf32, #tpu.memory_space<vmem>>, vector<128x128xf32>
    %cst_14 = arith.constant dense<0.000000e+00> : vector<8x128xf32>
    %23 = tpu.matmul %21, %22, %cst_14 {dimension_numbers = #tpu.dot_dimension_numbers<[1], [0], [0], [1], [0, 0, 1, 1], [], []>} : vector<8x128xf32>, vector<128x128xf32>, vector<8x128xf32> -> vector<8x128xf32>
    %c0_15 = arith.constant 0 : index
    %c0_16 = arith.constant 0 : index
    %24 = vector.load %arg7[%c0_15, %c0_16] : memref<1x128xf32, #tpu.memory_space<vmem>>, vector<1x128xf32>
    %25 = vector.broadcast %24 : vector<1x128xf32> to vector<8x128xf32>
    %26 = arith.addf %23, %25 : vector<8x128xf32>
    %c0_17 = arith.constant 0 : index
    %c0_18 = arith.constant 0 : index
    %27 = vector.load %arg8[%c0_17, %c0_18] : memref<8x128xf32, #tpu.memory_space<vmem>>, vector<8x128xf32>
    tpu.vector_store %arg8[%c0_17, %c0_18], %26 {strides = array<i32>} : memref<8x128xf32, #tpu.memory_space<vmem>>, vector<8x128xf32>,
    return
  }
  func.func @transform_0(%arg0: i32) -> (i32, i32) {
    %c0_i32 = arith.constant 0 : i32
    %c0_i32_0 = arith.constant 0 : i32
    return %arg0, %c0_i32 : i32, i32
  }
  func.func @transform_1(%arg0: i32) -> (i32, i32) {
    %c0_i32 = arith.constant 0 : i32
    %c0_i32_0 = arith.constant 0 : i32
    %c0_i32_1 = arith.constant 0 : i32
    return %c0_i32, %c0_i32_0 : i32, i32
  }
  func.func @transform_2(%arg0: i32) -> (i32, i32) {
    %c0_i32 = arith.constant 0 : i32
    %c0_i32_0 = arith.constant 0 : i32
    %c0_i32_1 = arith.constant 0 : i32
    return %c0_i32, %c0_i32_0 : i32, i32
  }
  func.func @transform_3(%arg0: i32) -> (i32, i32) {
    %c0_i32 = arith.constant 0 : i32
    %c0_i32_0 = arith.constant 0 : i32
    %c0_i32_1 = arith.constant 0 : i32
    return %c0_i32, %c0_i32_0 : i32, i32
  }
  func.func @transform_4(%arg0: i32) -> (i32, i32) {
    %c0_i32 = arith.constant 0 : i32
    %c0_i32_0 = arith.constant 0 : i32
    %c0_i32_1 = arith.constant 0 : i32
    return %c0_i32, %c0_i32_0 : i32, i32
  }
  func.func @transform_5(%arg0: i32) -> (i32, i32) {
    %c0_i32 = arith.constant 0 : i32
    %c0_i32_0 = arith.constant 0 : i32
    %c0_i32_1 = arith.constant 0 : i32
    return %c0_i32, %c0_i32_0 : i32, i32
  }
  func.func @transform_6(%arg0: i32) -> (i32, i32) {
    %c0_i32 = arith.constant 0 : i32
    %c0_i32_0 = arith.constant 0 : i32
    %c0_i32_1 = arith.constant 0 : i32
    return %c0_i32, %c0_i32_0 : i32, i32
  }
  func.func @transform_7(%arg0: i32) -> (i32, i32) {
    %c0_i32 = arith.constant 0 : i32
    %c0_i32_0 = arith.constant 0 : i32
    return %arg0, %c0_i32 : i32, i32
  }
}

module attributes {stable_mosaic.version = 11 : i64} {
  func.func @time_encoding_pis_kernel(%arg0: i32, %arg1: memref<8x1xf32, #tpu.memory_space<vmem>>, %arg2: memref<1x128xf32, #tpu.memory_space<vmem>>, %arg3: memref<1x128xf32, #tpu.memory_space<vmem>>, %arg4: memref<128x128xf32, #tpu.memory_space<vmem>>, %arg5: memref<1x128xf32, #tpu.memory_space<vmem>>, %arg6: memref<128x128xf32, #tpu.memory_space<vmem>>, %arg7: memref<1x128xf32, #tpu.memory_space<vmem>>, %arg8: memref<8x128xf32, #tpu.memory_space<vmem>>) attributes {dimension_semantics = [#tpu.dimension_semantics<parallel>], iteration_bounds = array<i64: 1>, scalar_prefetch = 0 : i64, scratch_operands = 0 : i64, tpu.core_type = #tpu.core_type<tc>, window_params = [{transform_indices = @transform_0, window_bounds = array<i64: 8, 1>}, {pipeline_mode = #tpu.pipeline_mode<synchronous>, transform_indices = @transform_1, window_bounds = array<i64: 1, 128>}, {pipeline_mode = #tpu.pipeline_mode<synchronous>, transform_indices = @transform_2, window_bounds = array<i64: 1, 128>}, {pipeline_mode = #tpu.pipeline_mode<synchronous>, transform_indices = @transform_3, window_bounds = array<i64: 128, 128>}, {pipeline_mode = #tpu.pipeline_mode<synchronous>, transform_indices = @transform_4, window_bounds = array<i64: 1, 128>}, {pipeline_mode = #tpu.pipeline_mode<synchronous>, transform_indices = @transform_5, window_bounds = array<i64: 128, 128>}, {pipeline_mode = #tpu.pipeline_mode<synchronous>, transform_indices = @transform_6, window_bounds = array<i64: 1, 128>}, {transform_indices = @transform_7, window_bounds = array<i64: 8, 128>}]} {
    %c0 = arith.constant 0 : index
    %c0_0 = arith.constant 0 : index
    %0 = vector.load %arg1[%c0, %c0_0] : memref<8x1xf32, #tpu.memory_space<vmem>>, vector<8x1xf32>
    %c0_1 = arith.constant 0 : index
    %c0_2 = arith.constant 0 : index
    %1 = vector.load %arg2[%c0_1, %c0_2] : memref<1x128xf32, #tpu.memory_space<vmem>>, vector<1x128xf32>
    %2 = vector.broadcast %0 : vector<8x1xf32> to vector<8x128xf32>
    %3 = vector.broadcast %1 : vector<1x128xf32> to vector<8x128xf32>
    %4 = arith.mulf %2, %3 : vector<8x128xf32>
    %c0_3 = arith.constant 0 : index
    %c0_4 = arith.constant 0 : index
    %5 = vector.load %arg3[%c0_3, %c0_4] : memref<1x128xf32, #tpu.memory_space<vmem>>, vector<1x128xf32>
    %6 = vector.broadcast %5 : vector<1x128xf32> to vector<8x128xf32>
    %7 = arith.addf %4, %6 : vector<8x128xf32>
    %8 = math.sin %7 : vector<8x128xf32>
    %c0_5 = arith.constant 0 : index
    %c0_6 = arith.constant 0 : index
    %9 = vector.load %arg4[%c0_5, %c0_6] : memref<128x128xf32, #tpu.memory_space<vmem>>, vector<128x128xf32>
    %cst = arith.constant dense<0.000000e+00> : vector<8x128xf32>
    %10 = tpu.matmul %8, %9, %cst {dimension_numbers = #tpu.dot_dimension_numbers<[1], [0], [0], [1], [0, 0, 1, 1], [], []>} : vector<8x128xf32>, vector<128x128xf32>, vector<8x128xf32> -> vector<8x128xf32>
    %c0_7 = arith.constant 0 : index
    %c0_8 = arith.constant 0 : index
    %11 = vector.load %arg5[%c0_7, %c0_8] : memref<1x128xf32, #tpu.memory_space<vmem>>, vector<1x128xf32>
    %12 = vector.broadcast %11 : vector<1x128xf32> to vector<8x128xf32>
    %13 = arith.addf %10, %12 : vector<8x128xf32>
    %cst_9 = arith.constant 5.000000e-01 : f32
    %14 = vector.broadcast %cst_9 : f32 to vector<8x128xf32>
    %15 = arith.mulf %14, %13 : vector<8x128xf32>
    %cst_10 = arith.constant 0.707106769 : f32
    %16 = vector.broadcast %cst_10 : f32 to vector<8x128xf32>
    %17 = arith.mulf %13, %16 : vector<8x128xf32>
    %18 = math.erf %17 : vector<8x128xf32>
    %cst_11 = arith.constant 1.000000e+00 : f32
    %19 = vector.broadcast %cst_11 : f32 to vector<8x128xf32>
    %20 = arith.addf %19, %18 : vector<8x128xf32>
    %21 = arith.mulf %15, %20 : vector<8x128xf32>
    %c0_12 = arith.constant 0 : index
    %c0_13 = arith.constant 0 : index
    %22 = vector.load %arg6[%c0_12, %c0_13] : memref<128x128xf32, #tpu.memory_space<vmem>>, vector<128x128xf32>
    %cst_14 = arith.constant dense<0.000000e+00> : vector<8x128xf32>
    %23 = tpu.matmul %21, %22, %cst_14 {dimension_numbers = #tpu.dot_dimension_numbers<[1], [0], [0], [1], [0, 0, 1, 1], [], []>} : vector<8x128xf32>, vector<128x128xf32>, vector<8x128xf32> -> vector<8x128xf32>
    %c0_15 = arith.constant 0 : index
    %c0_16 = arith.constant 0 : index
    %24 = vector.load %arg7[%c0_15, %c0_16] : memref<1x128xf32, #tpu.memory_space<vmem>>, vector<1x128xf32>
    %25 = vector.broadcast %24 : vector<1x128xf32> to vector<8x128xf32>
    %26 = arith.addf %23, %25 : vector<8x128xf32>
    %c0_17 = arith.constant 0 : index
    %c0_18 = arith.constant 0 : index
    %27 = vector.load %arg8[%c0_17, %c0_18] : memref<8x128xf32, #tpu.memory_space<vmem>>, vector<8x128xf32>
    tpu.vector_store %arg8[%c0_17, %c0_18], %26 {strides = array<i32>} : memref<8x128xf32, #tpu.memory_space<vmem>>, vector<8x128xf32>,
    return
  }
  func.func @transform_0(%arg0: i32) -> (i32, i32) {
    %c0_i32 = arith.constant 0 : i32
    %c0_i32_0 = arith.constant 0 : i32
    return %arg0, %c0_i32 : i32, i32
  }
  func.func @transform_1(%arg0: i32) -> (i32, i32) {
    %c0_i32 = arith.constant 0 : i32
    %c0_i32_0 = arith.constant 0 : i32
    %c0_i32_1 = arith.constant 0 : i32
    return %c0_i32, %c0_i32_0 : i32, i32
  }
  func.func @transform_2(%arg0: i32) -> (i32, i32) {
    %c0_i32 = arith.constant 0 : i32
    %c0_i32_0 = arith.constant 0 : i32
    %c0_i32_1 = arith.constant 0 : i32
    return %c0_i32, %c0_i32_0 : i32, i32
  }
  func.func @transform_3(%arg0: i32) -> (i32, i32) {
    %c0_i32 = arith.constant 0 : i32
    %c0_i32_0 = arith.constant 0 : i32
    %c0_i32_1 = arith.constant 0 : i32
    return %c0_i32, %c0_i32_0 : i32, i32
  }
  func.func @transform_4(%arg0: i32) -> (i32, i32) {
    %c0_i32 = arith.constant 0 : i32
    %c0_i32_0 = arith.constant 0 : i32
    %c0_i32_1 = arith.constant 0 : i32
    return %c0_i32, %c0_i32_0 : i32, i32
  }
  func.func @transform_5(%arg0: i32) -> (i32, i32) {
    %c0_i32 = arith.constant 0 : i32
    %c0_i32_0 = arith.constant 0 : i32
    %c0_i32_1 = arith.constant 0 : i32
    return %c0_i32, %c0_i32_0 : i32, i32
  }
  func.func @transform_6(%arg0: i32) -> (i32, i32) {
    %c0_i32 = arith.constant 0 : i32
    %c0_i32_0 = arith.constant 0 : i32
    %c0_i32_1 = arith.constant 0 : i32
    return %c0_i32, %c0_i32_0 : i32, i32
  }
  func.func @transform_7(%arg0: i32) -> (i32, i32) {
    %c0_i32 = arith.constant 0 : i32
    %c0_i32_0 = arith.constant 0 : i32
    return %arg0, %c0_i32 : i32, i32
  }
}

</mosaic_0001>

<llo_original>
// kernel: tpu_custom_call.1
$region0: #{tpu_custom_call.1}
  #allocation0 [shape = 'u32[]', space=smem, size = 0x4, offset = 0x4, fixed_abs, tag = 'smem constant byte address 0x4 - core index']
  #allocation1 [shape = 'u32[144,128]{1,0:T(1,128)}', space=vmem, size = 0x12000, scoped, tag = 'internal scratch']
  %s0 = inlined_call_operand.vmem [shape: f32[8,1], index: 0, kind: input, shape index: {}]
  %s1 = inlined_call_operand.vmem [shape: f32[1,128], index: 1, kind: input, shape index: {}]
  %s2 = inlined_call_operand.vmem [shape: f32[1,128], index: 2, kind: input, shape index: {}]
  %s3 = inlined_call_operand.hbm [shape: f32[128,128], index: 3, kind: input, shape index: {}]
  %s4 = inlined_call_operand.vmem [shape: f32[1,128], index: 4, kind: input, shape index: {}]
  %s5 = inlined_call_operand.hbm [shape: f32[128,128], index: 5, kind: input, shape index: {}]
  %s6 = inlined_call_operand.vmem [shape: f32[1,128], index: 6, kind: input, shape index: {}]
  %s7 = inlined_call_operand.hbm [shape: f32[8,128], index: 7, kind: output, shape index: {}]
  %s8 = sld [smem:[#allocation0]]
  $region46: #{tpu_custom_call.1} parent=0
    _
  %s10 = ssub.s32 1, %s8
  %s11 = scalar_select 0, %s10, %s8
  $region1: #{tpu_custom_call.1} parent=0
    #allocation2 [shape = 'u8[65536]{0}', space=vmem, size = 0x10000, scoped, tag = 'input window, operand 3, single buffered']
    #allocation3 [shape = 's32[1]{0}', space=sflag, size = 0x4, scoped, tag = 'scoped memory for tpu_custom_call.1']
    #allocation4 [shape = 's32[1]{0}', space=sflag, size = 0x4, scoped, tag = 'scoped memory for tpu_custom_call.1']
    #allocation5 [shape = 'u8[65536]{0}', space=vmem, size = 0x10000, scoped, tag = 'input window, operand 5, single buffered']
    #allocation6 [shape = 's32[1]{0}', space=sflag, size = 0x4, scoped, tag = 'scoped memory for tpu_custom_call.1']
    #allocation7 [shape = 'u8[4096]{0}', space=vmem, size = 0x1000, scoped, tag = 'output window, operand 0, single buffered']
    %12 = vsyncpa [#allocation3], 0
    %13 = vsyncpa [#allocation6], 0
    %14 = vsyncpa [#allocation4], 0
    // Predicated region
    $region2: #{tpu_custom_call.1} parent=1 // pred_check
      _
    $region3: #{tpu_custom_call.1} parent=1 // pred_check_branch
      %16 = sbr.rel (0) target = $region5
    $region4: #{tpu_custom_call.1} parent=1 // pred_region
      _
    $region5: #{tpu_custom_call.1} parent=1 // pred_fallthru
      _
    // Predicated region
    $region6: #{tpu_custom_call.1} parent=1 // pred_check
      _
    $region7: #{tpu_custom_call.1} parent=1 // pred_check_branch
      %18 = sbr.rel (0) target = $region9
    $region8: #{tpu_custom_call.1} parent=1 // pred_region
      _
    $region9: #{tpu_custom_call.1} parent=1 // pred_fallthru
      _
    // Predicated region
    $region10: #{tpu_custom_call.1} parent=1 // pred_check
      _
    $region11: #{tpu_custom_call.1} parent=1 // pred_check_branch
      %20 = sbr.rel (0) target = $region13
    $region12: #{tpu_custom_call.1} parent=1 // pred_region
      _
    $region13: #{tpu_custom_call.1} parent=1 // pred_fallthru
      _
    // Predicated region
    $region14: #{tpu_custom_call.1} parent=1 // pred_check
      _
    $region15: #{tpu_custom_call.1} parent=1 // pred_check_branch
      %22 = sbr.rel (0) target = $region17
    $region16: #{tpu_custom_call.1} parent=1 // pred_region
      %s24 = ssub.s32 2048, 2048
      %25 = vsyncadd [#allocation3], %s24
      %s26 = sshll.u32 [#allocation2], 4
      %s27 = int_to_ptr.vmem [resolvable:$true] %s26
      %32 = dma.hbm_to_vmem [thread:$0]  %s3, 2048, %s27, [#allocation3], 128, 128, 8
    $region17: #{tpu_custom_call.1} parent=1 // pred_fallthru
      _
    // Predicated region
    $region18: #{tpu_custom_call.1} parent=1 // pred_check
      _
    $region19: #{tpu_custom_call.1} parent=1 // pred_check_branch
      %34 = sbr.rel (0) target = $region21
    $region20: #{tpu_custom_call.1} parent=1 // pred_region
      _
    $region21: #{tpu_custom_call.1} parent=1 // pred_fallthru
      _
    // Predicated region
    $region22: #{tpu_custom_call.1} parent=1 // pred_check
      _
    $region23: #{tpu_custom_call.1} parent=1 // pred_check_branch
      %36 = sbr.rel (0) target = $region25
    $region24: #{tpu_custom_call.1} parent=1 // pred_region
      %s38 = ssub.s32 2048, 2048
      %39 = vsyncadd [#allocation6], %s38
      %s40 = sshll.u32 [#allocation5], 4
      %s41 = int_to_ptr.vmem [resolvable:$true] %s40
      %46 = dma.hbm_to_vmem [thread:$0]  %s5, 2048, %s41, [#allocation6], 128, 128, 8
    $region25: #{tpu_custom_call.1} parent=1 // pred_fallthru
      _
    // Predicated region
    $region26: #{tpu_custom_call.1} parent=1 // pred_check
      _
    $region27: #{tpu_custom_call.1} parent=1 // pred_check_branch
      %48 = sbr.rel (0) target = $region29
    $region28: #{tpu_custom_call.1} parent=1 // pred_region
      _
    $region29: #{tpu_custom_call.1} parent=1 // pred_fallthru
      _
    // Predicated region
    $region30: #{tpu_custom_call.1} parent=1 // pred_check
      _
    $region31: #{tpu_custom_call.1} parent=1 // pred_check_branch
      %50 = sbr.rel (0) target = $region33
    $region32: #{tpu_custom_call.1} parent=1 // pred_region
      %51 = dma.done [#allocation3], 2048
    $region33: #{tpu_custom_call.1} parent=1 // pred_fallthru
      _
    // Predicated region
    $region34: #{tpu_custom_call.1} parent=1 // pred_check
      _
    $region35: #{tpu_custom_call.1} parent=1 // pred_check_branch
      %53 = sbr.rel (0) target = $region37
    $region36: #{tpu_custom_call.1} parent=1 // pred_region
      %54 = dma.done [#allocation6], 2048
    $region37: #{tpu_custom_call.1} parent=1 // pred_fallthru
      _
    %v55 = vld [vmem:[%s0] sm:$0xff]
    %v56 = vld [vmem:[%s1] sm:$0x1]
    %58 = vset.pattern.permute.xlu0 0
    %59 = vperm.xlu0 %58, %v55
    %v60 = vpop.permute.xlu0 %59
    %v63 = vlaneseq
    %v64 = vshrl.u32 %v63, 7
    %v65 = vsub.s32 0, %v64
    %v66 = vrot.slane %v56, %v65
    %v68 = vmul.f32 %v60, %v66
    %v69 = vld [vmem:[%s2] sm:$0x1]
    %v71 = vlaneseq
    %v72 = vshrl.u32 %v71, 7
    %v73 = vsub.s32 0, %v72
    %v74 = vrot.slane %v69, %v73
    %v76 = vadd.f32 %v68, %v74
    %v77 = vand.u32 2147483647, %v76
    %vm78 = vcmp.le.f32.partialorder %v77, 0.7853982
    %vm79 = vcmp.lt.s32.totalorder %v76, 0
    %v80 = vand.u32 %v76, 2139095040
    %v81 = vshrl.u32 %v80, 23
    %v82 = vsub.s32 %v81, 127
    %v83 = vand.u32 2147483647, %v76
    %v84 = vand.u32 %v83, 8388607
    %v85 = vor.u32 %v84, 8388608
    %v86 = vsub.s32 0, %v85
    %v87 = vadd.s32 %v82, 1
    %vm88 = vcmp.gt.s32.totalorder %v87, 0
    %v89 = vsel %vm88, %v87, 0
    %v90 = vshrl.u32 %v89, 5
    %v91 = vand.u32 %v89, 31
    %v92 = vsub.s32 32, %v91
    %v93 = vshrl.u32 683565275, %v92
    %v94 = vshll.u32 683565275, %v91
    %v95 = vshrl.u32 2475754826, %v92
    %v96 = vor.u32 %v94, %v95
    %v97 = vshll.u32 2475754826, %v91
    %v98 = vshrl.u32 2131351028, %v92
    %v99 = vor.u32 %v97, %v98
    %v100 = vshll.u32 2131351028, %v91
    %v101 = vshrl.u32 2102212464, %v92
    %v102 = vor.u32 %v100, %v101
    %v103 = vshll.u32 2102212464, %v91
    %v104 = vshrl.u32 920167782, %v92
    %v105 = vor.u32 %v103, %v104
    %v106 = vshll.u32 920167782, %v91
    %v107 = vshrl.u32 1326507024, %v92
    %v108 = vor.u32 %v106, %v107
    %vm109 = vcmp.lt.s32.totalorder %v90, 1
    %vm110 = vcmp.lt.s32.totalorder %v90, 2
    %vm111 = vcmp.lt.s32.totalorder %v90, 3
    %vm112 = vcmp.lt.s32.totalorder %v90, 4
    %v113 = vsel %vm109, %v93, %v96
    %v114 = vsel %vm112, %v102, 2102212464
    %v115 = vsel %vm111, %v99, %v114
    %v116 = vsel %vm110, %v113, %v115
    %v117 = vsel %vm109, %v96, %v99
    %v118 = vsel %vm112, %v105, 920167782
    %v119 = vsel %vm111, %v102, %v118
    %v120 = vsel %vm110, %v117, %v119
    %v121 = vsel %vm109, %v99, %v102
    %v122 = vsel %vm112, %v108, 1326507024
    %v123 = vsel %vm111, %v105, %v122
    %v124 = vsel %vm110, %v121, %v123
    %v125 = vshll.u32 %v85, 8
    %v126 = vmul.u32.u64.compose %v125, %v124
    %v127 = vextract.low.u32 %v126
    %v128 = vextract.high.u32 %v126
    %v129 = vmul.u32.u64.compose %v125, %v120
    %v130 = vextract.low.u32 %v129
    %v131 = vextract.high.u32 %v129
    %v132 = vmul.u32 %v125, %v116
    %v133 = vadd.s32 %v128, %v130
    %vm134 = vc.u32 %v128, %v130
    %v135 = vadd.s32 %v131, 1
    %v136 = vsel %vm134, %v135, %v131
    %v137 = vadd.s32 %v132, %v136
    %v138 = vadd.s32 %v137, 536870912
    %v139 = vshrl.u32 %v138, 30
    %v140 = vshll.u32 %v139, 30
    %v141 = vsub.s32 %v137, %v140
    %vm142 = vcmp.lt.s32.totalorder %v141, 0
    %v143 = vsub.s32 0, %v141
    %v144 = vsel %vm142, %v143, %v141
    %v145 = vclz %v144
    %v146 = vsub.s32 %v145, 2
    %vm147 = vcmp.gt.s32.totalorder 0, %v146
    %v148 = vsel %vm147, 0, %v146
    %v149 = vsub.s32 32, %v148
    %v150 = vshll.u32 %v141, %v148
    %v151 = vshrl.u32 %v133, %v149
    %v152 = vor.u32 %v150, %v151
    %v153 = vsub.s32 4294967266, %v148
    %v154 = vadd.s32 %v153, 127
    %v155 = vshll.u32 %v154, 23
    %v156 = vor.u32 4788187, %v155
    %v157 = vand.u32 2147483647, %v156
    %v159 = vcvt.s32.f32 %v152
    %v160 = vmul.f32 %v159, %v157
    %v161 = vxor.u32 %v160, 2147483648
    %v162 = vsel %vm79, %v161, %v160
    %v163 = vsub.s32 4, %v139
    %v164 = vsel %vm79, %v163, %v139
    %v165 = vsel %vm78, %v76, %v162
    %v166 = vsel %vm78, 0, %v164
    %v167 = vcosq.f32.pop %v165
    %v168 = vsinq.f32.pop %v165
    %vm169 = vweird.f32 %v76
    %v170 = vadd.s32 %v166, 3
    %v171 = vand.u32 %v170, 3
    %vm172 = vcmp.lt.s32.totalorder %v171, 2
    %vm173 = vcmp.eq.s32.totalorder %v171, 0
    %v174 = vxor.u32 %v168, 2147483648
    %v175 = vsel %vm173, %v167, %v174
    %vm176 = vcmp.eq.s32.totalorder %v171, 2
    %v177 = vxor.u32 %v167, 2147483648
    %v178 = vsel %vm176, %v177, %v168
    %v179 = vsel %vm172, %v175, %v178
    %v180 = vsel %vm169, nan, %v179
    %v181 = vld [vmem:[#allocation2] sm:$0xff]
    %v182 = vld [vmem:[#allocation2 + $0x8] sm:$0xff]
    %v183 = vld [vmem:[#allocation2 + $0x10] sm:$0xff]
    %v184 = vld [vmem:[#allocation2 + $0x18] sm:$0xff]
    %v185 = vld [vmem:[#allocation2 + $0x20] sm:$0xff]
    %v186 = vld [vmem:[#allocation2 + $0x28] sm:$0xff]
    %v187 = vld [vmem:[#allocation2 + $0x30] sm:$0xff]
    %v188 = vld [vmem:[#allocation2 + $0x38] sm:$0xff]
    %v189 = vld [vmem:[#allocation2 + $0x40] sm:$0xff]
    %v190 = vld [vmem:[#allocation2 + $0x48] sm:$0xff]
    %v191 = vld [vmem:[#allocation2 + $0x50] sm:$0xff]
    %v192 = vld [vmem:[#allocation2 + $0x58] sm:$0xff]
    %v193 = vld [vmem:[#allocation2 + $0x60] sm:$0xff]
    %v194 = vld [vmem:[#allocation2 + $0x68] sm:$0xff]
    %v195 = vld [vmem:[#allocation2 + $0x70] sm:$0xff]
    %v196 = vld [vmem:[#allocation2 + $0x78] sm:$0xff]
    %v197 = vld [vmem:[%s4] sm:$0x1]
    %v199 = vlaneseq
    %v200 = vshrl.u32 %v199, 7
    %v201 = vsub.s32 0, %v200
    %v202 = vrot.slane %v197, %v201
    %204 = vmatprep.subr.mxu0 0.0
    %205 = vmatpush1.msra.mxu0 %v181
    %206 = vmatprep.subr.mxu0 0.0
    %207 = vmatpush1.msra.mxu0 %v182
    %208 = vmatprep.subr.mxu0 0.0
    %209 = vmatpush1.msra.mxu0 %v183
    %210 = vmatprep.subr.mxu0 0.0
    %211 = vmatpush1.msra.mxu0 %v184
    %212 = vmatprep.subr.mxu0 0.0
    %213 = vmatpush1.msra.mxu0 %v185
    %214 = vmatprep.subr.mxu0 0.0
    %215 = vmatpush1.msra.mxu0 %v186
    %216 = vmatprep.subr.mxu0 0.0
    %217 = vmatpush1.msra.mxu0 %v187
    %218 = vmatprep.subr.mxu0 0.0
    %219 = vmatpush1.msra.mxu0 %v188
    %220 = vmatprep.subr.mxu0 0.0
    %221 = vmatpush1.msra.mxu0 %v189
    %222 = vmatprep.subr.mxu0 0.0
    %223 = vmatpush1.msra.mxu0 %v190
    %224 = vmatprep.subr.mxu0 0.0
    %225 = vmatpush1.msra.mxu0 %v191
    %226 = vmatprep.subr.mxu0 0.0
    %227 = vmatpush1.msra.mxu0 %v192
    %228 = vmatprep.subr.mxu0 0.0
    %229 = vmatpush1.msra.mxu0 %v193
    %230 = vmatprep.subr.mxu0 0.0
    %231 = vmatpush1.msra.mxu0 %v194
    %232 = vmatprep.subr.mxu0 0.0
    %233 = vmatpush1.msra.mxu0 %v195
    %234 = vmatprep.subr.mxu0 0.0
    %235 = vmatpush1.msra.mxu0 %v196
    %236 = vmatprep.subr.mxu0 0.0
    %237 = vmatpush1.msra.mxu0 0.0
    %238 = vmatprep.subr.mxu0 0.0
    %239 = vmatpush1.msra.mxu0 0.0
    %240 = vmatprep.subr.mxu0 0.0
    %241 = vmatpush1.msra.mxu0 0.0
    %242 = vmatprep.subr.mxu0 0.0
    %243 = vmatpush1.msra.mxu0 0.0
    %244 = vmatprep.subr.mxu0 0.0
    %245 = vmatpush1.msra.mxu0 0.0
    %246 = vmatprep.subr.mxu0 0.0
    %247 = vmatpush1.msra.mxu0 0.0
    %248 = vmatprep.subr.mxu0 0.0
    %249 = vmatpush1.msra.mxu0 0.0
    %250 = vmatprep.subr.mxu0 0.0
    %251 = vmatpush1.msra.mxu0 0.0
    %252 = vmatprep.subr.mxu0 0.0
    %253 = vmatpush1.msra.mxu0 0.0
    %254 = vmatprep.subr.mxu0 0.0
    %255 = vmatpush1.msra.mxu0 0.0
    %256 = vmatprep.subr.mxu0 0.0
    %257 = vmatpush1.msra.mxu0 0.0
    %258 = vmatprep.subr.mxu0 0.0
    %259 = vmatpush1.msra.mxu0 0.0
    %260 = vmatprep.subr.mxu0 0.0
    %261 = vmatpush1.msra.mxu0 0.0
    %262 = vmatprep.subr.mxu0 0.0
    %263 = vmatpush1.msra.mxu0 0.0
    %264 = vmatprep.subr.mxu0 0.0
    %265 = vmatpush1.msra.mxu0 0.0
    %266 = vmatprep.subr.mxu0 0.0
    %267 = vmatpush1.msra.mxu0 0.0
    %268 = vmatprep.mubr.f32.mxu0 0.0
    %269 = vmatmul.mubr.f32.gmra.mrb[0].mxu0 %v180
    %v270 = vpop.f32.mrb[0].mxu0
    %v271 = vadd.f32 %v202, %v270
    %v272 = vpop.f32.mrb[0].mxu0
    %273 = vdwg.mxu0
    %v274 = vmul.f32 %v271, 0.5
    %v275 = vmul.f32 %v271, 0.70710677
    %v276 = verf.f32.pop %v275
    %v277 = vadd.f32 %v276, 1.0
    %v278 = vmul.f32 %v274, %v277
    %v279 = vld [vmem:[#allocation5] sm:$0xff]
    %v280 = vld [vmem:[#allocation5 + $0x8] sm:$0xff]
    %v281 = vld [vmem:[#allocation5 + $0x10] sm:$0xff]
    %v282 = vld [vmem:[#allocation5 + $0x18] sm:$0xff]
    %v283 = vld [vmem:[#allocation5 + $0x20] sm:$0xff]
    %v284 = vld [vmem:[#allocation5 + $0x28] sm:$0xff]
    %v285 = vld [vmem:[#allocation5 + $0x30] sm:$0xff]
    %v286 = vld [vmem:[#allocation5 + $0x38] sm:$0xff]
    %v287 = vld [vmem:[#allocation5 + $0x40] sm:$0xff]
    %v288 = vld [vmem:[#allocation5 + $0x48] sm:$0xff]
    %v289 = vld [vmem:[#allocation5 + $0x50] sm:$0xff]
    %v290 = vld [vmem:[#allocation5 + $0x58] sm:$0xff]
    %v291 = vld [vmem:[#allocation5 + $0x60] sm:$0xff]
    %v292 = vld [vmem:[#allocation5 + $0x68] sm:$0xff]
    %v293 = vld [vmem:[#allocation5 + $0x70] sm:$0xff]
    %v294 = vld [vmem:[#allocation5 + $0x78] sm:$0xff]
    %v295 = vld [vmem:[%s6] sm:$0x1]
    %v297 = vlaneseq
    %v298 = vshrl.u32 %v297, 7
    %v299 = vsub.s32 0, %v298
    %v300 = vrot.slane %v295, %v299
    %302 = vmatprep.subr.mxu0 0.0
    %303 = vmatpush1.msra.mxu0 %v279
    %304 = vmatprep.subr.mxu0 0.0
    %305 = vmatpush1.msra.mxu0 %v280
    %306 = vmatprep.subr.mxu0 0.0
    %307 = vmatpush1.msra.mxu0 %v281
    %308 = vmatprep.subr.mxu0 0.0
    %309 = vmatpush1.msra.mxu0 %v282
    %310 = vmatprep.subr.mxu0 0.0
    %311 = vmatpush1.msra.mxu0 %v283
    %312 = vmatprep.subr.mxu0 0.0
    %313 = vmatpush1.msra.mxu0 %v284
    %314 = vmatprep.subr.mxu0 0.0
    %315 = vmatpush1.msra.mxu0 %v285
    %316 = vmatprep.subr.mxu0 0.0
    %317 = vmatpush1.msra.mxu0 %v286
    %318 = vmatprep.subr.mxu0 0.0
    %319 = vmatpush1.msra.mxu0 %v287
    %320 = vmatprep.subr.mxu0 0.0
    %321 = vmatpush1.msra.mxu0 %v288
    %322 = vmatprep.subr.mxu0 0.0
    %323 = vmatpush1.msra.mxu0 %v289
    %324 = vmatprep.subr.mxu0 0.0
    %325 = vmatpush1.msra.mxu0 %v290
    %326 = vmatprep.subr.mxu0 0.0
    %327 = vmatpush1.msra.mxu0 %v291
    %328 = vmatprep.subr.mxu0 0.0
    %329 = vmatpush1.msra.mxu0 %v292
    %330 = vmatprep.subr.mxu0 0.0
    %331 = vmatpush1.msra.mxu0 %v293
    %332 = vmatprep.subr.mxu0 0.0
    %333 = vmatpush1.msra.mxu0 %v294
    %334 = vmatprep.subr.mxu0 0.0
    %335 = vmatpush1.msra.mxu0 0.0
    %336 = vmatprep.subr.mxu0 0.0
    %337 = vmatpush1.msra.mxu0 0.0
    %338 = vmatprep.subr.mxu0 0.0
    %339 = vmatpush1.msra.mxu0 0.0
    %340 = vmatprep.subr.mxu0 0.0
    %341 = vmatpush1.msra.mxu0 0.0
    %342 = vmatprep.subr.mxu0 0.0
    %343 = vmatpush1.msra.mxu0 0.0
    %344 = vmatprep.subr.mxu0 0.0
    %345 = vmatpush1.msra.mxu0 0.0
    %346 = vmatprep.subr.mxu0 0.0
    %347 = vmatpush1.msra.mxu0 0.0
    %348 = vmatprep.subr.mxu0 0.0
    %349 = vmatpush1.msra.mxu0 0.0
    %350 = vmatprep.subr.mxu0 0.0
    %351 = vmatpush1.msra.mxu0 0.0
    %352 = vmatprep.subr.mxu0 0.0
    %353 = vmatpush1.msra.mxu0 0.0
    %354 = vmatprep.subr.mxu0 0.0
    %355 = vmatpush1.msra.mxu0 0.0
    %356 = vmatprep.subr.mxu0 0.0
    %357 = vmatpush1.msra.mxu0 0.0
    %358 = vmatprep.subr.mxu0 0.0
    %359 = vmatpush1.msra.mxu0 0.0
    %360 = vmatprep.subr.mxu0 0.0
    %361 = vmatpush1.msra.mxu0 0.0
    %362 = vmatprep.subr.mxu0 0.0
    %363 = vmatpush1.msra.mxu0 0.0
    %364 = vmatprep.subr.mxu0 0.0
    %365 = vmatpush1.msra.mxu0 0.0
    %366 = vmatprep.mubr.f32.mxu0 0.0
    %367 = vmatmul.mubr.f32.gmra.mrb[0].mxu0 %v278
    %v368 = vpop.f32.mrb[0].mxu0
    %v369 = vadd.f32 %v300, %v368
    %v370 = vpop.f32.mrb[0].mxu0
    %371 = vdwg.mxu0
    %372 = vst [vmem:[#allocation7] sm:$0xff] %v369
    // Predicated region
    $region38: #{tpu_custom_call.1} parent=1 // pred_check
      _
    $region39: #{tpu_custom_call.1} parent=1 // pred_check_branch
      %374 = sbr.rel (0) target = $region41
    $region40: #{tpu_custom_call.1} parent=1 // pred_region
      %s376 = ssub.s32 128, 128
      %377 = vsyncadd [#allocation4], %s376
      %s379 = sshll.u32 [#allocation7], 4
      %s380 = int_to_ptr.vmem [resolvable:$true] %s379
      %382 = dma.vmem_to_hbm [thread:$0]  %s380, 128, %s7, [#allocation4]
    $region41: #{tpu_custom_call.1} parent=1 // pred_fallthru
      _
    // Predicated region
    $region42: #{tpu_custom_call.1} parent=1 // pred_check
      _
    $region43: #{tpu_custom_call.1} parent=1 // pred_check_branch
      %384 = sbr.rel (0) target = $region45
    $region44: #{tpu_custom_call.1} parent=1 // pred_region
      %385 = dma.done [#allocation4], 128
    $region45: #{tpu_custom_call.1} parent=1 // pred_fallthru
      _
    %386 = vsyncpa [#allocation3], 1
    %387 = vsyncpa [#allocation6], 1
    %388 = vsyncpa [#allocation4], 1

// kernel: tpu_custom_call.1
$region0: #{tpu_custom_call.1}
  #allocation0 [shape = 'u32[]', space=smem, size = 0x4, offset = 0x4, fixed_abs, tag = 'smem constant byte address 0x4 - core index']
  #allocation1 [shape = 'u32[144,128]{1,0:T(1,128)}', space=vmem, size = 0x12000, scoped, tag = 'internal scratch']
  %s0 = inlined_call_operand.vmem [shape: f32[8,1], index: 0, kind: input, shape index: {}]
  %s1 = inlined_call_operand.vmem [shape: f32[1,128], index: 1, kind: input, shape index: {}]
  %s2 = inlined_call_operand.vmem [shape: f32[1,128], index: 2, kind: input, shape index: {}]
  %s3 = inlined_call_operand.hbm [shape: f32[128,128], index: 3, kind: input, shape index: {}]
  %s4 = inlined_call_operand.vmem [shape: f32[1,128], index: 4, kind: input, shape index: {}]
  %s5 = inlined_call_operand.hbm [shape: f32[128,128], index: 5, kind: input, shape index: {}]
  %s6 = inlined_call_operand.vmem [shape: f32[1,128], index: 6, kind: input, shape index: {}]
  %s7 = inlined_call_operand.hbm [shape: f32[8,128], index: 7, kind: output, shape index: {}]
  %s8 = sld [smem:[#allocation0]]
  $region46: #{tpu_custom_call.1} parent=0
    _
  %s10 = ssub.s32 1, %s8
  %s11 = scalar_select 0, %s10, %s8
  $region1: #{tpu_custom_call.1} parent=0
    #allocation2 [shape = 'u8[65536]{0}', space=vmem, size = 0x10000, scoped, tag = 'input window, operand 3, single buffered']
    #allocation3 [shape = 's32[1]{0}', space=sflag, size = 0x4, scoped, tag = 'scoped memory for tpu_custom_call.1']
    #allocation4 [shape = 's32[1]{0}', space=sflag, size = 0x4, scoped, tag = 'scoped memory for tpu_custom_call.1']
    #allocation5 [shape = 'u8[65536]{0}', space=vmem, size = 0x10000, scoped, tag = 'input window, operand 5, single buffered']
    #allocation6 [shape = 's32[1]{0}', space=sflag, size = 0x4, scoped, tag = 'scoped memory for tpu_custom_call.1']
    #allocation7 [shape = 'u8[4096]{0}', space=vmem, size = 0x1000, scoped, tag = 'output window, operand 0, single buffered']
    %12 = vsyncpa [#allocation3], 0
    %13 = vsyncpa [#allocation6], 0
    %14 = vsyncpa [#allocation4], 0
    // Predicated region
    $region2: #{tpu_custom_call.1} parent=1 // pred_check
      _
    $region3: #{tpu_custom_call.1} parent=1 // pred_check_branch
      %16 = sbr.rel (0) target = $region5
    $region4: #{tpu_custom_call.1} parent=1 // pred_region
      _
    $region5: #{tpu_custom_call.1} parent=1 // pred_fallthru
      _
    // Predicated region
    $region6: #{tpu_custom_call.1} parent=1 // pred_check
      _
    $region7: #{tpu_custom_call.1} parent=1 // pred_check_branch
      %18 = sbr.rel (0) target = $region9
    $region8: #{tpu_custom_call.1} parent=1 // pred_region
      _
    $region9: #{tpu_custom_call.1} parent=1 // pred_fallthru
      _
    // Predicated region
    $region10: #{tpu_custom_call.1} parent=1 // pred_check
      _
    $region11: #{tpu_custom_call.1} parent=1 // pred_check_branch
      %20 = sbr.rel (0) target = $region13
    $region12: #{tpu_custom_call.1} parent=1 // pred_region
      _
    $region13: #{tpu_custom_call.1} parent=1 // pred_fallthru
      _
    // Predicated region
    $region14: #{tpu_custom_call.1} parent=1 // pred_check
      _
    $region15: #{tpu_custom_call.1} parent=1 // pred_check_branch
      %22 = sbr.rel (0) target = $region17
    $region16: #{tpu_custom_call.1} parent=1 // pred_region
      %s24 = ssub.s32 2048, 2048
      %25 = vsyncadd [#allocation3], %s24
      %s26 = sshll.u32 [#allocation2], 4
      %s27 = int_to_ptr.vmem [resolvable:$true] %s26
      %32 = dma.hbm_to_vmem [thread:$0]  %s3, 2048, %s27, [#allocation3], 128, 128, 8
    $region17: #{tpu_custom_call.1} parent=1 // pred_fallthru
      _
    // Predicated region
    $region18: #{tpu_custom_call.1} parent=1 // pred_check
      _
    $region19: #{tpu_custom_call.1} parent=1 // pred_check_branch
      %34 = sbr.rel (0) target = $region21
    $region20: #{tpu_custom_call.1} parent=1 // pred_region
      _
    $region21: #{tpu_custom_call.1} parent=1 // pred_fallthru
      _
    // Predicated region
    $region22: #{tpu_custom_call.1} parent=1 // pred_check
      _
    $region23: #{tpu_custom_call.1} parent=1 // pred_check_branch
      %36 = sbr.rel (0) target = $region25
    $region24: #{tpu_custom_call.1} parent=1 // pred_region
      %s38 = ssub.s32 2048, 2048
      %39 = vsyncadd [#allocation6], %s38
      %s40 = sshll.u32 [#allocation5], 4
      %s41 = int_to_ptr.vmem [resolvable:$true] %s40
      %46 = dma.hbm_to_vmem [thread:$0]  %s5, 2048, %s41, [#allocation6], 128, 128, 8
    $region25: #{tpu_custom_call.1} parent=1 // pred_fallthru
      _
    // Predicated region
    $region26: #{tpu_custom_call.1} parent=1 // pred_check
      _
    $region27: #{tpu_custom_call.1} parent=1 // pred_check_branch
      %48 = sbr.rel (0) target = $region29
    $region28: #{tpu_custom_call.1} parent=1 // pred_region
      _
    $region29: #{tpu_custom_call.1} parent=1 // pred_fallthru
      _
    // Predicated region
    $region30: #{tpu_custom_call.1} parent=1 // pred_check
      _
    $region31: #{tpu_custom_call.1} parent=1 // pred_check_branch
      %50 = sbr.rel (0) target = $region33
    $region32: #{tpu_custom_call.1} parent=1 // pred_region
      %51 = dma.done [#allocation3], 2048
    $region33: #{tpu_custom_call.1} parent=1 // pred_fallthru
      _
    // Predicated region
    $region34: #{tpu_custom_call.1} parent=1 // pred_check
      _
    $region35: #{tpu_custom_call.1} parent=1 // pred_check_branch
      %53 = sbr.rel (0) target = $region37
    $region36: #{tpu_custom_call.1} parent=1 // pred_region
      %54 = dma.done [#allocation6], 2048
    $region37: #{tpu_custom_call.1} parent=1 // pred_fallthru
      _
    %v55 = vld [vmem:[%s0] sm:$0xff]
    %v56 = vld [vmem:[%s1] sm:$0x1]
    %58 = vset.pattern.permute.xlu0 0
    %59 = vperm.xlu0 %58, %v55
    %v60 = vpop.permute.xlu0 %59
    %v63 = vlaneseq
    %v64 = vshrl.u32 %v63, 7
    %v65 = vsub.s32 0, %v64
    %v66 = vrot.slane %v56, %v65
    %v68 = vmul.f32 %v60, %v66
    %v69 = vld [vmem:[%s2] sm:$0x1]
    %v71 = vlaneseq
    %v72 = vshrl.u32 %v71, 7
    %v73 = vsub.s32 0, %v72
    %v74 = vrot.slane %v69, %v73
    %v76 = vadd.f32 %v68, %v74
    %v77 = vand.u32 2147483647, %v76
    %vm78 = vcmp.le.f32.partialorder %v77, 0.7853982
    %vm79 = vcmp.lt.s32.totalorder %v76, 0
    %v80 = vand.u32 %v76, 2139095040
    %v81 = vshrl.u32 %v80, 23
    %v82 = vsub.s32 %v81, 127
    %v83 = vand.u32 2147483647, %v76
    %v84 = vand.u32 %v83, 8388607
    %v85 = vor.u32 %v84, 8388608
    %v86 = vsub.s32 0, %v85
    %v87 = vadd.s32 %v82, 1
    %vm88 = vcmp.gt.s32.totalorder %v87, 0
    %v89 = vsel %vm88, %v87, 0
    %v90 = vshrl.u32 %v89, 5
    %v91 = vand.u32 %v89, 31
    %v92 = vsub.s32 32, %v91
    %v93 = vshrl.u32 683565275, %v92
    %v94 = vshll.u32 683565275, %v91
    %v95 = vshrl.u32 2475754826, %v92
    %v96 = vor.u32 %v94, %v95
    %v97 = vshll.u32 2475754826, %v91
    %v98 = vshrl.u32 2131351028, %v92
    %v99 = vor.u32 %v97, %v98
    %v100 = vshll.u32 2131351028, %v91
    %v101 = vshrl.u32 2102212464, %v92
    %v102 = vor.u32 %v100, %v101
    %v103 = vshll.u32 2102212464, %v91
    %v104 = vshrl.u32 920167782, %v92
    %v105 = vor.u32 %v103, %v104
    %v106 = vshll.u32 920167782, %v91
    %v107 = vshrl.u32 1326507024, %v92
    %v108 = vor.u32 %v106, %v107
    %vm109 = vcmp.lt.s32.totalorder %v90, 1
    %vm110 = vcmp.lt.s32.totalorder %v90, 2
    %vm111 = vcmp.lt.s32.totalorder %v90, 3
    %vm112 = vcmp.lt.s32.totalorder %v90, 4
    %v113 = vsel %vm109, %v93, %v96
    %v114 = vsel %vm112, %v102, 2102212464
    %v115 = vsel %vm111, %v99, %v114
    %v116 = vsel %vm110, %v113, %v115
    %v117 = vsel %vm109, %v96, %v99
    %v118 = vsel %vm112, %v105, 920167782
    %v119 = vsel %vm111, %v102, %v118
    %v120 = vsel %vm110, %v117, %v119
    %v121 = vsel %vm109, %v99, %v102
    %v122 = vsel %vm112, %v108, 1326507024
    %v123 = vsel %vm111, %v105, %v122
    %v124 = vsel %vm110, %v121, %v123
    %v125 = vshll.u32 %v85, 8
    %v126 = vmul.u32.u64.compose %v125, %v124
    %v127 = vextract.low.u32 %v126
    %v128 = vextract.high.u32 %v126
    %v129 = vmul.u32.u64.compose %v125, %v120
    %v130 = vextract.low.u32 %v129
    %v131 = vextract.high.u32 %v129
    %v132 = vmul.u32 %v125, %v116
    %v133 = vadd.s32 %v128, %v130
    %vm134 = vc.u32 %v128, %v130
    %v135 = vadd.s32 %v131, 1
    %v136 = vsel %vm134, %v135, %v131
    %v137 = vadd.s32 %v132, %v136
    %v138 = vadd.s32 %v137, 536870912
    %v139 = vshrl.u32 %v138, 30
    %v140 = vshll.u32 %v139, 30
    %v141 = vsub.s32 %v137, %v140
    %vm142 = vcmp.lt.s32.totalorder %v141, 0
    %v143 = vsub.s32 0, %v141
    %v144 = vsel %vm142, %v143, %v141
    %v145 = vclz %v144
    %v146 = vsub.s32 %v145, 2
    %vm147 = vcmp.gt.s32.totalorder 0, %v146
    %v148 = vsel %vm147, 0, %v146
    %v149 = vsub.s32 32, %v148
    %v150 = vshll.u32 %v141, %v148
    %v151 = vshrl.u32 %v133, %v149
    %v152 = vor.u32 %v150, %v151
    %v153 = vsub.s32 4294967266, %v148
    %v154 = vadd.s32 %v153, 127
    %v155 = vshll.u32 %v154, 23
    %v156 = vor.u32 4788187, %v155
    %v157 = vand.u32 2147483647, %v156
    %v159 = vcvt.s32.f32 %v152
    %v160 = vmul.f32 %v159, %v157
    %v161 = vxor.u32 %v160, 2147483648
    %v162 = vsel %vm79, %v161, %v160
    %v163 = vsub.s32 4, %v139
    %v164 = vsel %vm79, %v163, %v139
    %v165 = vsel %vm78, %v76, %v162
    %v166 = vsel %vm78, 0, %v164
    %v167 = vcosq.f32.pop %v165
    %v168 = vsinq.f32.pop %v165
    %vm169 = vweird.f32 %v76
    %v170 = vadd.s32 %v166, 3
    %v171 = vand.u32 %v170, 3
    %vm172 = vcmp.lt.s32.totalorder %v171, 2
    %vm173 = vcmp.eq.s32.totalorder %v171, 0
    %v174 = vxor.u32 %v168, 2147483648
    %v175 = vsel %vm173, %v167, %v174
    %vm176 = vcmp.eq.s32.totalorder %v171, 2
    %v177 = vxor.u32 %v167, 2147483648
    %v178 = vsel %vm176, %v177, %v168
    %v179 = vsel %vm172, %v175, %v178
    %v180 = vsel %vm169, nan, %v179
    %v181 = vld [vmem:[#allocation2] sm:$0xff]
    %v182 = vld [vmem:[#allocation2 + $0x8] sm:$0xff]
    %v183 = vld [vmem:[#allocation2 + $0x10] sm:$0xff]
    %v184 = vld [vmem:[#allocation2 + $0x18] sm:$0xff]
    %v185 = vld [vmem:[#allocation2 + $0x20] sm:$0xff]
    %v186 = vld [vmem:[#allocation2 + $0x28] sm:$0xff]
    %v187 = vld [vmem:[#allocation2 + $0x30] sm:$0xff]
    %v188 = vld [vmem:[#allocation2 + $0x38] sm:$0xff]
    %v189 = vld [vmem:[#allocation2 + $0x40] sm:$0xff]
    %v190 = vld [vmem:[#allocation2 + $0x48] sm:$0xff]
    %v191 = vld [vmem:[#allocation2 + $0x50] sm:$0xff]
    %v192 = vld [vmem:[#allocation2 + $0x58] sm:$0xff]
    %v193 = vld [vmem:[#allocation2 + $0x60] sm:$0xff]
    %v194 = vld [vmem:[#allocation2 + $0x68] sm:$0xff]
    %v195 = vld [vmem:[#allocation2 + $0x70] sm:$0xff]
    %v196 = vld [vmem:[#allocation2 + $0x78] sm:$0xff]
    %v197 = vld [vmem:[%s4] sm:$0x1]
    %v199 = vlaneseq
    %v200 = vshrl.u32 %v199, 7
    %v201 = vsub.s32 0, %v200
    %v202 = vrot.slane %v197, %v201
    %204 = vmatprep.subr.mxu0 0.0
    %205 = vmatpush1.msra.mxu0 %v181
    %206 = vmatprep.subr.mxu0 0.0
    %207 = vmatpush1.msra.mxu0 %v182
    %208 = vmatprep.subr.mxu0 0.0
    %209 = vmatpush1.msra.mxu0 %v183
    %210 = vmatprep.subr.mxu0 0.0
    %211 = vmatpush1.msra.mxu0 %v184
    %212 = vmatprep.subr.mxu0 0.0
    %213 = vmatpush1.msra.mxu0 %v185
    %214 = vmatprep.subr.mxu0 0.0
    %215 = vmatpush1.msra.mxu0 %v186
    %216 = vmatprep.subr.mxu0 0.0
    %217 = vmatpush1.msra.mxu0 %v187
    %218 = vmatprep.subr.mxu0 0.0
    %219 = vmatpush1.msra.mxu0 %v188
    %220 = vmatprep.subr.mxu0 0.0
    %221 = vmatpush1.msra.mxu0 %v189
    %222 = vmatprep.subr.mxu0 0.0
    %223 = vmatpush1.msra.mxu0 %v190
    %224 = vmatprep.subr.mxu0 0.0
    %225 = vmatpush1.msra.mxu0 %v191
    %226 = vmatprep.subr.mxu0 0.0
    %227 = vmatpush1.msra.mxu0 %v192
    %228 = vmatprep.subr.mxu0 0.0
    %229 = vmatpush1.msra.mxu0 %v193
    %230 = vmatprep.subr.mxu0 0.0
    %231 = vmatpush1.msra.mxu0 %v194
    %232 = vmatprep.subr.mxu0 0.0
    %233 = vmatpush1.msra.mxu0 %v195
    %234 = vmatprep.subr.mxu0 0.0
    %235 = vmatpush1.msra.mxu0 %v196
    %236 = vmatprep.subr.mxu0 0.0
    %237 = vmatpush1.msra.mxu0 0.0
    %238 = vmatprep.subr.mxu0 0.0
    %239 = vmatpush1.msra.mxu0 0.0
    %240 = vmatprep.subr.mxu0 0.0
    %241 = vmatpush1.msra.mxu0 0.0
    %242 = vmatprep.subr.mxu0 0.0
    %243 = vmatpush1.msra.mxu0 0.0
    %244 = vmatprep.subr.mxu0 0.0
    %245 = vmatpush1.msra.mxu0 0.0
    %246 = vmatprep.subr.mxu0 0.0
    %247 = vmatpush1.msra.mxu0 0.0
    %248 = vmatprep.subr.mxu0 0.0
    %249 = vmatpush1.msra.mxu0 0.0
    %250 = vmatprep.subr.mxu0 0.0
    %251 = vmatpush1.msra.mxu0 0.0
    %252 = vmatprep.subr.mxu0 0.0
    %253 = vmatpush1.msra.mxu0 0.0
    %254 = vmatprep.subr.mxu0 0.0
    %255 = vmatpush1.msra.mxu0 0.0
    %256 = vmatprep.subr.mxu0 0.0
    %257 = vmatpush1.msra.mxu0 0.0
    %258 = vmatprep.subr.mxu0 0.0
    %259 = vmatpush1.msra.mxu0 0.0
    %260 = vmatprep.subr.mxu0 0.0
    %261 = vmatpush1.msra.mxu0 0.0
    %262 = vmatprep.subr.mxu0 0.0
    %263 = vmatpush1.msra.mxu0 0.0
    %264 = vmatprep.subr.mxu0 0.0
    %265 = vmatpush1.msra.mxu0 0.0
    %266 = vmatprep.subr.mxu0 0.0
    %267 = vmatpush1.msra.mxu0 0.0
    %268 = vmatprep.mubr.f32.mxu0 0.0
    %269 = vmatmul.mubr.f32.gmra.mrb[0].mxu0 %v180
    %v270 = vpop.f32.mrb[0].mxu0
    %v271 = vadd.f32 %v202, %v270
    %v272 = vpop.f32.mrb[0].mxu0
    %273 = vdwg.mxu0
    %v274 = vmul.f32 %v271, 0.5
    %v275 = vmul.f32 %v271, 0.70710677
    %v276 = verf.f32.pop %v275
    %v277 = vadd.f32 %v276, 1.0
    %v278 = vmul.f32 %v274, %v277
    %v279 = vld [vmem:[#allocation5] sm:$0xff]
    %v280 = vld [vmem:[#allocation5 + $0x8] sm:$0xff]
    %v281 = vld [vmem:[#allocation5 + $0x10] sm:$0xff]
    %v282 = vld [vmem:[#allocation5 + $0x18] sm:$0xff]
    %v283 = vld [vmem:[#allocation5 + $0x20] sm:$0xff]
    %v284 = vld [vmem:[#allocation5 + $0x28] sm:$0xff]
    %v285 = vld [vmem:[#allocation5 + $0x30] sm:$0xff]
    %v286 = vld [vmem:[#allocation5 + $0x38] sm:$0xff]
    %v287 = vld [vmem:[#allocation5 + $0x40] sm:$0xff]
    %v288 = vld [vmem:[#allocation5 + $0x48] sm:$0xff]
    %v289 = vld [vmem:[#allocation5 + $0x50] sm:$0xff]
    %v290 = vld [vmem:[#allocation5 + $0x58] sm:$0xff]
    %v291 = vld [vmem:[#allocation5 + $0x60] sm:$0xff]
    %v292 = vld [vmem:[#allocation5 + $0x68] sm:$0xff]
    %v293 = vld [vmem:[#allocation5 + $0x70] sm:$0xff]
    %v294 = vld [vmem:[#allocation5 + $0x78] sm:$0xff]
    %v295 = vld [vmem:[%s6] sm:$0x1]
    %v297 = vlaneseq
    %v298 = vshrl.u32 %v297, 7
    %v299 = vsub.s32 0, %v298
    %v300 = vrot.slane %v295, %v299
    %302 = vmatprep.subr.mxu0 0.0
    %303 = vmatpush1.msra.mxu0 %v279
    %304 = vmatprep.subr.mxu0 0.0
    %305 = vmatpush1.msra.mxu0 %v280
    %306 = vmatprep.subr.mxu0 0.0
    %307 = vmatpush1.msra.mxu0 %v281
    %308 = vmatprep.subr.mxu0 0.0
    %309 = vmatpush1.msra.mxu0 %v282
    %310 = vmatprep.subr.mxu0 0.0
    %311 = vmatpush1.msra.mxu0 %v283
    %312 = vmatprep.subr.mxu0 0.0
    %313 = vmatpush1.msra.mxu0 %v284
    %314 = vmatprep.subr.mxu0 0.0
    %315 = vmatpush1.msra.mxu0 %v285
    %316 = vmatprep.subr.mxu0 0.0
    %317 = vmatpush1.msra.mxu0 %v286
    %318 = vmatprep.subr.mxu0 0.0
    %319 = vmatpush1.msra.mxu0 %v287
    %320 = vmatprep.subr.mxu0 0.0
    %321 = vmatpush1.msra.mxu0 %v288
    %322 = vmatprep.subr.mxu0 0.0
    %323 = vmatpush1.msra.mxu0 %v289
    %324 = vmatprep.subr.mxu0 0.0
    %325 = vmatpush1.msra.mxu0 %v290
    %326 = vmatprep.subr.mxu0 0.0
    %327 = vmatpush1.msra.mxu0 %v291
    %328 = vmatprep.subr.mxu0 0.0
    %329 = vmatpush1.msra.mxu0 %v292
    %330 = vmatprep.subr.mxu0 0.0
    %331 = vmatpush1.msra.mxu0 %v293
    %332 = vmatprep.subr.mxu0 0.0
    %333 = vmatpush1.msra.mxu0 %v294
    %334 = vmatprep.subr.mxu0 0.0
    %335 = vmatpush1.msra.mxu0 0.0
    %336 = vmatprep.subr.mxu0 0.0
    %337 = vmatpush1.msra.mxu0 0.0
    %338 = vmatprep.subr.mxu0 0.0
    %339 = vmatpush1.msra.mxu0 0.0
    %340 = vmatprep.subr.mxu0 0.0
    %341 = vmatpush1.msra.mxu0 0.0
    %342 = vmatprep.subr.mxu0 0.0
    %343 = vmatpush1.msra.mxu0 0.0
    %344 = vmatprep.subr.mxu0 0.0
    %345 = vmatpush1.msra.mxu0 0.0
    %346 = vmatprep.subr.mxu0 0.0
    %347 = vmatpush1.msra.mxu0 0.0
    %348 = vmatprep.subr.mxu0 0.0
    %349 = vmatpush1.msra.mxu0 0.0
    %350 = vmatprep.subr.mxu0 0.0
    %351 = vmatpush1.msra.mxu0 0.0
    %352 = vmatprep.subr.mxu0 0.0
    %353 = vmatpush1.msra.mxu0 0.0
    %354 = vmatprep.subr.mxu0 0.0
    %355 = vmatpush1.msra.mxu0 0.0
    %356 = vmatprep.subr.mxu0 0.0
    %357 = vmatpush1.msra.mxu0 0.0
    %358 = vmatprep.subr.mxu0 0.0
    %359 = vmatpush1.msra.mxu0 0.0
    %360 = vmatprep.subr.mxu0 0.0
    %361 = vmatpush1.msra.mxu0 0.0
    %362 = vmatprep.subr.mxu0 0.0
    %363 = vmatpush1.msra.mxu0 0.0
    %364 = vmatprep.subr.mxu0 0.0
    %365 = vmatpush1.msra.mxu0 0.0
    %366 = vmatprep.mubr.f32.mxu0 0.0
    %367 = vmatmul.mubr.f32.gmra.mrb[0].mxu0 %v278
    %v368 = vpop.f32.mrb[0].mxu0
    %v369 = vadd.f32 %v300, %v368
    %v370 = vpop.f32.mrb[0].mxu0
    %371 = vdwg.mxu0
    %372 = vst [vmem:[#allocation7] sm:$0xff] %v369
    // Predicated region
    $region38: #{tpu_custom_call.1} parent=1 // pred_check
      _
    $region39: #{tpu_custom_call.1} parent=1 // pred_check_branch
      %374 = sbr.rel (0) target = $region41
    $region40: #{tpu_custom_call.1} parent=1 // pred_region
      %s376 = ssub.s32 128, 128
      %377 = vsyncadd [#allocation4], %s376
      %s379 = sshll.u32 [#allocation7], 4
      %s380 = int_to_ptr.vmem [resolvable:$true] %s379
      %382 = dma.vmem_to_hbm [thread:$0]  %s380, 128, %s7, [#allocation4]
    $region41: #{tpu_custom_call.1} parent=1 // pred_fallthru
      _
    // Predicated region
    $region42: #{tpu_custom_call.1} parent=1 // pred_check
      _
    $region43: #{tpu_custom_call.1} parent=1 // pred_check_branch
      %384 = sbr.rel (0) target = $region45
    $region44: #{tpu_custom_call.1} parent=1 // pred_region
      %385 = dma.done [#allocation4], 128
    $region45: #{tpu_custom_call.1} parent=1 // pred_fallthru
      _
    %386 = vsyncpa [#allocation3], 1
    %387 = vsyncpa [#allocation6], 1
    %388 = vsyncpa [#allocation4], 1

</llo_original>
